<compile_context>
chip_gen: v7x
topology: tpu7x:2x2x1
jax: 0.10.0
libtpu: 0.0.40
codegen_flags: <defaults>
</compile_context>

<pallas_src>
import jax
import jax.numpy as jnp
from jax.experimental import pallas as pl
from jax.experimental.pallas import tpu as pltpu


def _segblock_kernel(w_ref, b_ref, x_ref, o_ref):
    """Fused 1x1-conv + sigmoid on one dense (S, 128) spatial slab.

    w_ref: SMEM (cls, C_in) f32  -- conv weight (1x1 spatial dims squeezed)
    b_ref: SMEM (cls,)      f32  -- conv bias
    x_ref: VMEM (C_in, S, 128)   -- activations, pixels fill sublanes + lanes
    o_ref: VMEM (cls,  S, 128)   -- output, same dense layout
    """
    cls, c_in = w_ref.shape
    # Load each input channel once as a dense (S, 128) slab; cast to f32 here
    # (free) so bf16 I/O needs no wrapper-side cast pass.
    xs = [x_ref[k].astype(jnp.float32) for k in range(c_in)]
    for c in range(cls):
        # K=C_in contraction as unrolled VPU FMAs with SMEM-scalar broadcasts.
        acc = xs[0] * w_ref[c, 0] + b_ref[c]
        for k in range(1, c_in):
            acc = acc + xs[k] * w_ref[c, k]
        o_ref[c] = jax.nn.sigmoid(acc).astype(o_ref.dtype)


def segblock_forward(x_nchw, weight, bias, *, target_pixels_per_step=65536,
                     out_dtype=None):
    """Forward pass of SegBlock (kernel_size=1 conv + sigmoid).

    x_nchw: (N, C_in, H, W)            -- f32 or bf16
    weight: (cls, C_in) or (cls, C_in, 1, 1)
    bias:   (cls,)
    returns (N, cls, H, W) in `out_dtype` (defaults to the input dtype)
    """
    N, C_in, H, W = x_nchw.shape
    HW = H * W
    cls = weight.shape[0]
    in_dtype = x_nchw.dtype
    out_dtype = in_dtype if out_dtype is None else out_dtype

    # Lane-align the spatial axis.  For common segmentation shapes HW is
    # already a multiple of 128 and this is a pure (free) reshape.
    # TODO(synk): handle a ragged spatial tail with in-kernel masked stores
    # instead of this pad+slice fallback (extra HBM pass when it triggers).
    HW_pad = ((HW + 127) // 128) * 128
    x3 = x_nchw.reshape(N, C_in, HW)
    if HW_pad != HW:
        x3 = jnp.pad(x3, ((0, 0), (0, 0), (0, HW_pad - HW)))
    R = HW_pad // 128                      # sublane rows of 128 pixels each
    x4 = x3.reshape(N, C_in, R, 128)       # free reshape, channels stay contiguous

    # --- spatial tile selection (S sublane rows == S*128 pixels per step) ---
    itemsize = max(jnp.dtype(in_dtype).itemsize, jnp.dtype(out_dtype).itemsize)
    target_S = max(8, (target_pixels_per_step // 128) // 8 * 8)
    # Keep double-buffered (in + out) tile bytes well under the scoped-VMEM
    # defaults (16/32 MiB) so the same tiling is safe on v5e/v6e/v7x.
    vmem_budget = 12 * 1024 * 1024
    while target_S > 8 and 2 * (C_in + cls) * target_S * 128 * itemsize > vmem_budget:
        target_S = max(8, (target_S // 2) // 8 * 8)

    if R <= target_S:
        S = R                              # block dim == full dim: (8,128)-rule OK
        # v7x megacore: with a single image, split spatially so both TCs work.
        if N == 1 and R >= 16:
            S = (((R + 1) // 2) + 7) // 8 * 8
    else:
        S = target_S                       # multiple of 8 by construction

    grid = (N, pl.cdiv(R, S))              # edge block (if any) is masked by Pallas

    w_mat = weight.reshape(cls, C_in).astype(jnp.float32)
    b_vec = bias.reshape(cls).astype(jnp.float32)

    cost = pl.CostEstimate(
        flops=2 * N * HW_pad * C_in * cls,
        transcendentals=N * HW_pad * cls,
        bytes_accessed=(N * HW_pad * (C_in * jnp.dtype(in_dtype).itemsize
                                      + cls * jnp.dtype(out_dtype).itemsize)
                        + 4 * (cls * C_in + cls)),
    )

    out4 = pl.pallas_call(
        _segblock_kernel,
        out_shape=jax.ShapeDtypeStruct((N, cls, R, 128), out_dtype),
        grid_spec=pl.GridSpec(
            grid=grid,
            in_specs=[
                pl.BlockSpec(memory_space=pltpu.MemorySpace.SMEM),   # weight (resident)
                pl.BlockSpec(memory_space=pltpu.MemorySpace.SMEM),   # bias   (resident)
                pl.BlockSpec((None, C_in, S, 128), lambda n, j: (n, 0, j, 0)),
            ],
            out_specs=pl.BlockSpec((None, cls, S, 128), lambda n, j: (n, 0, j, 0)),
        ),
        compiler_params=pltpu.CompilerParams(
            dimension_semantics=("parallel", "parallel"),
        ),
        cost_estimate=cost,
    )(w_mat, b_vec, x4)

    out3 = out4.reshape(N, cls, HW_pad)
    if HW_pad != HW:
        out3 = out3[:, :, :HW]
    return out3.reshape(N, cls, H, W)


if __name__ == "__main__":
    # Shapes consistent with the module: batch=2, input_channel=4, 16x16, cls=3.
    N, C_in, H, W, CLS = 2, 4, 16, 16, 3

    key = jax.random.PRNGKey(0)
    kx, kw, kb = jax.random.split(key, 3)

    x = jax.random.normal(kx, (N, C_in, H, W), dtype=jnp.float32)
    # Deterministic synthetic conv parameters (shapes of nn.Conv2d(C_in, cls, 1, 1)).
    weight = jax.random.normal(kw, (CLS, C_in), dtype=jnp.float32) * 0.1
    bias = jax.random.normal(kb, (CLS,), dtype=jnp.float32) * 0.1

    out = segblock_forward(x, weight, bias)
    out = jax.block_until_ready(out)

    # Reference: 1x1 conv == per-pixel channel matmul, then sigmoid.
    ref = jax.nn.sigmoid(
        jnp.einsum("nchw,oc->nohw", x, weight) + bias[None, :, None, None]
    )
    assert out.shape == (N, CLS, H, W)
    assert jnp.allclose(out, ref, atol=1e-5, rtol=1e-5)

    print("KERNEL_OK")
</pallas_src>

<mosaic_0001>
module attributes {stable_mosaic.version = 11 : i64} {
  func.func @_segblock_kernel(%arg0: i32, %arg1: i32, %arg2: memref<3x4xf32, #tpu.memory_space<smem>>, %arg3: memref<3xf32, #tpu.memory_space<smem>>, %arg4: memref<1x4x2x128xf32, #tpu.memory_space<vmem>>, %arg5: memref<1x3x2x128xf32, #tpu.memory_space<vmem>>) attributes {dimension_semantics = [#tpu.dimension_semantics<parallel>, #tpu.dimension_semantics<parallel>], iteration_bounds = array<i64: 2, 1>, scalar_prefetch = 0 : i64, scratch_operands = 0 : i64, tpu.core_type = #tpu.core_type<tc>, window_params = [{transform_indices = @transform_0, window_bounds = array<i64: 3, 4>}, {transform_indices = @transform_1, window_bounds = array<i64: 3>}, {transform_indices = @transform_2, window_bounds = array<i64: 1, 4, 2, 128>}, {transform_indices = @transform_3, window_bounds = array<i64: 1, 3, 2, 128>}]} {
    %c0 = arith.constant 0 : index
    %c0_0 = arith.constant 0 : index
    %c0_1 = arith.constant 0 : index
    %c0_2 = arith.constant 0 : index
    %0 = vector.load %arg4[%c0, %c0_0, %c0_1, %c0_2] : memref<1x4x2x128xf32, #tpu.memory_space<vmem>>, vector<1x1x2x128xf32>
    %1 = vector.shape_cast %0 : vector<1x1x2x128xf32> to vector<2x128xf32>
    %c0_3 = arith.constant 0 : index
    %c1 = arith.constant 1 : index
    %c0_4 = arith.constant 0 : index
    %c0_5 = arith.constant 0 : index
    %2 = vector.load %arg4[%c0_3, %c1, %c0_4, %c0_5] : memref<1x4x2x128xf32, #tpu.memory_space<vmem>>, vector<1x1x2x128xf32>
    %3 = vector.shape_cast %2 : vector<1x1x2x128xf32> to vector<2x128xf32>
    %c0_6 = arith.constant 0 : index
    %c2 = arith.constant 2 : index
    %c0_7 = arith.constant 0 : index
    %c0_8 = arith.constant 0 : index
    %4 = vector.load %arg4[%c0_6, %c2, %c0_7, %c0_8] : memref<1x4x2x128xf32, #tpu.memory_space<vmem>>, vector<1x1x2x128xf32>
    %5 = vector.shape_cast %4 : vector<1x1x2x128xf32> to vector<2x128xf32>
    %c0_9 = arith.constant 0 : index
    %c3 = arith.constant 3 : index
    %c0_10 = arith.constant 0 : index
    %c0_11 = arith.constant 0 : index
    %6 = vector.load %arg4[%c0_9, %c3, %c0_10, %c0_11] : memref<1x4x2x128xf32, #tpu.memory_space<vmem>>, vector<1x1x2x128xf32>
    %7 = vector.shape_cast %6 : vector<1x1x2x128xf32> to vector<2x128xf32>
    %c0_12 = arith.constant 0 : index
    %c0_13 = arith.constant 0 : index
    %8 = memref.load %arg2[%c0_12, %c0_13] : memref<3x4xf32, #tpu.memory_space<smem>>
    %9 = vector.broadcast %8 : f32 to vector<2x128xf32>
    %10 = arith.mulf %1, %9 : vector<2x128xf32>
    %c0_14 = arith.constant 0 : index
    %11 = memref.load %arg3[%c0_14] : memref<3xf32, #tpu.memory_space<smem>>
    %12 = vector.broadcast %11 : f32 to vector<2x128xf32>
    %13 = arith.addf %10, %12 : vector<2x128xf32>
    %c0_15 = arith.constant 0 : index
    %c1_16 = arith.constant 1 : index
    %14 = memref.load %arg2[%c0_15, %c1_16] : memref<3x4xf32, #tpu.memory_space<smem>>
    %15 = vector.broadcast %14 : f32 to vector<2x128xf32>
    %16 = arith.mulf %3, %15 : vector<2x128xf32>
    %17 = arith.addf %13, %16 : vector<2x128xf32>
    %c0_17 = arith.constant 0 : index
    %c2_18 = arith.constant 2 : index
    %18 = memref.load %arg2[%c0_17, %c2_18] : memref<3x4xf32, #tpu.memory_space<smem>>
    %19 = vector.broadcast %18 : f32 to vector<2x128xf32>
    %20 = arith.mulf %5, %19 : vector<2x128xf32>
    %21 = arith.addf %17, %20 : vector<2x128xf32>
    %c0_19 = arith.constant 0 : index
    %c3_20 = arith.constant 3 : index
    %22 = memref.load %arg2[%c0_19, %c3_20] : memref<3x4xf32, #tpu.memory_space<smem>>
    %23 = vector.broadcast %22 : f32 to vector<2x128xf32>
    %24 = arith.mulf %7, %23 : vector<2x128xf32>
    %25 = arith.addf %21, %24 : vector<2x128xf32>
    %26 = arith.negf %25 : vector<2x128xf32>
    %27 = math.exp %26 : vector<2x128xf32>
    %cst = arith.constant 1.000000e+00 : f32
    %28 = vector.broadcast %cst : f32 to vector<2x128xf32>
    %29 = arith.addf %28, %27 : vector<2x128xf32>
    %30 = arith.divf %28, %29 : vector<2x128xf32>
    %c0_21 = arith.constant 0 : index
    %c0_22 = arith.constant 0 : index
    %c0_23 = arith.constant 0 : index
    %c0_24 = arith.constant 0 : index
    %31 = vector.load %arg5[%c0_21, %c0_22, %c0_23, %c0_24] : memref<1x3x2x128xf32, #tpu.memory_space<vmem>>, vector<1x1x2x128xf32>
    %32 = vector.shape_cast %31 : vector<1x1x2x128xf32> to vector<2x128xf32>
    %33 = vector.shape_cast %30 : vector<2x128xf32> to vector<1x1x2x128xf32>
    tpu.vector_store %arg5[%c0_21, %c0_22, %c0_23, %c0_24], %33 {strides = array<i32>} : memref<1x3x2x128xf32, #tpu.memory_space<vmem>>, vector<1x1x2x128xf32>,
    %c1_25 = arith.constant 1 : index
    %c0_26 = arith.constant 0 : index
    %34 = memref.load %arg2[%c1_25, %c0_26] : memref<3x4xf32, #tpu.memory_space<smem>>
    %35 = vector.broadcast %34 : f32 to vector<2x128xf32>
    %36 = arith.mulf %1, %35 : vector<2x128xf32>
    %c1_27 = arith.constant 1 : index
    %37 = memref.load %arg3[%c1_27] : memref<3xf32, #tpu.memory_space<smem>>
    %38 = vector.broadcast %37 : f32 to vector<2x128xf32>
    %39 = arith.addf %36, %38 : vector<2x128xf32>
    %c1_28 = arith.constant 1 : index
    %c1_29 = arith.constant 1 : index
    %40 = memref.load %arg2[%c1_28, %c1_29] : memref<3x4xf32, #tpu.memory_space<smem>>
    %41 = vector.broadcast %40 : f32 to vector<2x128xf32>
    %42 = arith.mulf %3, %41 : vector<2x128xf32>
    %43 = arith.addf %39, %42 : vector<2x128xf32>
    %c1_30 = arith.constant 1 : index
    %c2_31 = arith.constant 2 : index
    %44 = memref.load %arg2[%c1_30, %c2_31] : memref<3x4xf32, #tpu.memory_space<smem>>
    %45 = vector.broadcast %44 : f32 to vector<2x128xf32>
    %46 = arith.mulf %5, %45 : vector<2x128xf32>
    %47 = arith.addf %43, %46 : vector<2x128xf32>
    %c1_32 = arith.constant 1 : index
    %c3_33 = arith.constant 3 : index
    %48 = memref.load %arg2[%c1_32, %c3_33] : memref<3x4xf32, #tpu.memory_space<smem>>
    %49 = vector.broadcast %48 : f32 to vector<2x128xf32>
    %50 = arith.mulf %7, %49 : vector<2x128xf32>
    %51 = arith.addf %47, %50 : vector<2x128xf32>
    %52 = arith.negf %51 : vector<2x128xf32>
    %53 = math.exp %52 : vector<2x128xf32>
    %cst_34 = arith.constant 1.000000e+00 : f32
    %54 = vector.broadcast %cst_34 : f32 to vector<2x128xf32>
    %55 = arith.addf %54, %53 : vector<2x128xf32>
    %56 = arith.divf %54, %55 : vector<2x128xf32>
    %c0_35 = arith.constant 0 : index
    %c1_36 = arith.constant 1 : index
    %c0_37 = arith.constant 0 : index
    %c0_38 = arith.constant 0 : index
    %57 = vector.load %arg5[%c0_35, %c1_36, %c0_37, %c0_38] : memref<1x3x2x128xf32, #tpu.memory_space<vmem>>, vector<1x1x2x128xf32>
    %58 = vector.shape_cast %57 : vector<1x1x2x128xf32> to vector<2x128xf32>
    %59 = vector.shape_cast %56 : vector<2x128xf32> to vector<1x1x2x128xf32>
    tpu.vector_store %arg5[%c0_35, %c1_36, %c0_37, %c0_38], %59 {strides = array<i32>} : memref<1x3x2x128xf32, #tpu.memory_space<vmem>>, vector<1x1x2x128xf32>,
    %c2_39 = arith.constant 2 : index
    %c0_40 = arith.constant 0 : index
    %60 = memref.load %arg2[%c2_39, %c0_40] : memref<3x4xf32, #tpu.memory_space<smem>>
    %61 = vector.broadcast %60 : f32 to vector<2x128xf32>
    %62 = arith.mulf %1, %61 : vector<2x128xf32>
    %c2_41 = arith.constant 2 : index
    %63 = memref.load %arg3[%c2_41] : memref<3xf32, #tpu.memory_space<smem>>
    %64 = vector.broadcast %63 : f32 to vector<2x128xf32>
    %65 = arith.addf %62, %64 : vector<2x128xf32>
    %c2_42 = arith.constant 2 : index
    %c1_43 = arith.constant 1 : index
    %66 = memref.load %arg2[%c2_42, %c1_43] : memref<3x4xf32, #tpu.memory_space<smem>>
    %67 = vector.broadcast %66 : f32 to vector<2x128xf32>
    %68 = arith.mulf %3, %67 : vector<2x128xf32>
    %69 = arith.addf %65, %68 : vector<2x128xf32>
    %c2_44 = arith.constant 2 : index
    %c2_45 = arith.constant 2 : index
    %70 = memref.load %arg2[%c2_44, %c2_45] : memref<3x4xf32, #tpu.memory_space<smem>>
    %71 = vector.broadcast %70 : f32 to vector<2x128xf32>
    %72 = arith.mulf %5, %71 : vector<2x128xf32>
    %73 = arith.addf %69, %72 : vector<2x128xf32>
    %c2_46 = arith.constant 2 : index
    %c3_47 = arith.constant 3 : index
    %74 = memref.load %arg2[%c2_46, %c3_47] : memref<3x4xf32, #tpu.memory_space<smem>>
    %75 = vector.broadcast %74 : f32 to vector<2x128xf32>
    %76 = arith.mulf %7, %75 : vector<2x128xf32>
    %77 = arith.addf %73, %76 : vector<2x128xf32>
    %78 = arith.negf %77 : vector<2x128xf32>
    %79 = math.exp %78 : vector<2x128xf32>
    %cst_48 = arith.constant 1.000000e+00 : f32
    %80 = vector.broadcast %cst_48 : f32 to vector<2x128xf32>
    %81 = arith.addf %80, %79 : vector<2x128xf32>
    %82 = arith.divf %80, %81 : vector<2x128xf32>
    %c0_49 = arith.constant 0 : index
    %c2_50 = arith.constant 2 : index
    %c0_51 = arith.constant 0 : index
    %c0_52 = arith.constant 0 : index
    %83 = vector.load %arg5[%c0_49, %c2_50, %c0_51, %c0_52] : memref<1x3x2x128xf32, #tpu.memory_space<vmem>>, vector<1x1x2x128xf32>
    %84 = vector.shape_cast %83 : vector<1x1x2x128xf32> to vector<2x128xf32>
    %85 = vector.shape_cast %82 : vector<2x128xf32> to vector<1x1x2x128xf32>
    tpu.vector_store %arg5[%c0_49, %c2_50, %c0_51, %c0_52], %85 {strides = array<i32>} : memref<1x3x2x128xf32, #tpu.memory_space<vmem>>, vector<1x1x2x128xf32>,
    return
  }
  func.func @transform_0(%arg0: i32, %arg1: i32) -> (i32, i32) {
    %c0_i32 = arith.constant 0 : i32
    %c0_i32_0 = arith.constant 0 : i32
    %c0_i32_1 = arith.constant 0 : i32
    return %c0_i32, %c0_i32_0 : i32, i32
  }
  func.func @transform_1(%arg0: i32, %arg1: i32) -> i32 {
    %c0_i32 = arith.constant 0 : i32
    %c0_i32_0 = arith.constant 0 : i32
    return %c0_i32 : i32
  }
  func.func @transform_2(%arg0: i32, %arg1: i32) -> (i32, i32, i32, i32) {
    %c0_i32 = arith.constant 0 : i32
    %c0_i32_0 = arith.constant 0 : i32
    %c0_i32_1 = arith.constant 0 : i32
    return %arg0, %c0_i32, %arg1, %c0_i32_0 : i32, i32, i32, i32
  }
  func.func @transform_3(%arg0: i32, %arg1: i32) -> (i32, i32, i32, i32) {
    %c0_i32 = arith.constant 0 : i32
    %c0_i32_0 = arith.constant 0 : i32
    %c0_i32_1 = arith.constant 0 : i32
    return %arg0, %c0_i32, %arg1, %c0_i32_0 : i32, i32, i32, i32
  }
}

</mosaic_0001>

<llo_original>
// kernel: tpu_custom_call.1
$region0: #{tpu_custom_call.1}
  #allocation0 [shape = 'u32[]', space=smem, size = 0x4, offset = 0x4, fixed_abs, tag = 'smem constant byte address 0x4 - core index']
  #allocation1 [shape = 'u32[144,128]{1,0:T(1,128)}', space=vmem, size = 0x12000, scoped, tag = 'internal scratch']
  %s0 = inlined_call_operand.hbm [shape: f32[3,4], index: 0, kind: input, shape index: {}]
  %s1 = inlined_call_operand.vmem [shape: f32[3], index: 1, kind: input, shape index: {}]
  %s2 = inlined_call_operand.hbm [shape: f32[2,4,2,128], index: 2, kind: input, shape index: {}]
  %s3 = inlined_call_operand.hbm [shape: f32[2,3,2,128], index: 3, kind: output, shape index: {}]
  %s4 = sld [smem:[#allocation0]]
  $region57: #{tpu_custom_call.1} parent=0
    _
  %s6 = ssub.s32 1, %s4
  %s7 = scalar_select 0, %s6, %s4
  $region1: #{tpu_custom_call.1} parent=0
    #allocation2 [shape = 'u8[2048]{0}', space=smem, size = 0x800, scoped, tag = 'input window, operand 0, single buffered']
    #allocation3 [shape = 's32[2]{0}', space=sflag, size = 0x8, scoped, tag = 'scoped memory for tpu_custom_call.1']
    #allocation4 [shape = 's32[2]{0}', space=sflag, size = 0x8, scoped, tag = 'scoped memory for tpu_custom_call.1']
    #allocation5 [shape = 's32[2]{0}', space=sflag, size = 0x8, scoped, tag = 'scoped memory for tpu_custom_call.1']
    #allocation6 [shape = 's32[2]{0}', space=sflag, size = 0x8, scoped, tag = 'scoped memory for tpu_custom_call.1']
    #allocation7 [shape = 'u8[512]{0}', space=smem, size = 0x200, scoped, tag = 'input window, operand 1, single buffered']
    #allocation8 [shape = 'u8[8192]{0}', space=vmem, size = 0x2000, scoped, tag = 'input window, operand 2']
    #allocation9 [shape = 'u8[6144]{0}', space=vmem, size = 0x1800, scoped, tag = 'output window, operand 0']
    %8 = vsyncpa [#allocation5], 0
    %9 = vsyncpa [#allocation6], 0
    %10 = vsyncpa [#allocation3], 0
    %s11 = scalar_lea.sflag [#allocation3], 1
    %12 = vsyncpa %s11, 0
    %13 = vsyncpa [#allocation4], 0
    %s14 = scalar_lea.sflag [#allocation4], 1
    %15 = vsyncpa %s14, 0
    loop: start=0, step=1, limit=4
    $region2: #{tpu_custom_call.1} parent=1 // loop_pre_header
      _
    $region3: #{tpu_custom_call.1} parent=1 // loop_header
      %s17 = sphi 0, %s21
      %p18 = scmp.ge.s32.totalorder %s17, 4
      %s24 = sphi 0, %s36
      %s25 = sphi 0, %s32
      %s26 = sphi 0, %s24
      %s27 = sphi 0, %s25
      %s28 = sphi 0, %s26
      %s29 = sphi 0, %s27
      %s37 = sphi 0, %s37
      %s39 = sphi 0, %s37
      %s40 = sphi 0, %s39
      %s54 = sphi 0, %s40
      %s58 = sphi 0, %s58
      %s60 = sphi 0, %s58
      %s61 = sphi 0, %s60
      %s75 = sphi 0, %s61
      %s83 = sphi 0, %s85
      %s86 = sphi 0, %s83
      %s87 = sphi 0, %s86
      %s103 = sphi 0, %s87
      %s111 = sphi 0, %s113
      %s114 = sphi 0, %s111
      %s115 = sphi 0, %s114
      %s131 = sphi 0, %s115
    $region4: #{tpu_custom_call.1} parent=1 // loop_header_branch
      %20 = sbr.rel (%p18) target = $region8
    $region5: #{tpu_custom_call.1} parent=1 // loop_body
      %s22 = ssub.s32 %s17, 1
      %s23 = ssub.s32 %s17, 2
      %s30 = sadd.s32 1, %s25
      %p31 = scmp.ge.s32.totalorder %s30, 1
      %s32 = scalar_select %p31, 0, %s30
      %s33 = sadd.s32 1, %s24
      %s34 = scalar_select %p31, %s33, %s24
      %p35 = scmp.ge.s32.totalorder %s34, 2
      %s36 = scalar_select %p35, 0, %s34
      %s38 = sadd.s32 %s37, 1
      %p41 = scmp.eq.s32.totalorder %s17, 1
      %p42 = scmp.ne.s32.totalorder %s37, %s39
      %p43 = scmp.eq.s32.totalorder %s17, 0
      %p44 = por %p42, %p43
      %p45 = scmp.ne.s32.totalorder %s37, %s39
      %p46 = scmp.eq.s32.totalorder %s22, 1
      %p47 = por %p45, %p46
      %p48 = scmp.ne.s32.totalorder %s39, %s40
      %p49 = scmp.eq.s32.totalorder %s22, 0
      %p50 = por %p48, %p49
      %p51 = scmp.ne.s32.totalorder %s39, %s40
      %p52 = scmp.eq.s32.totalorder %s23, 1
      %p53 = por %p51, %p52
      %p55 = scmp.ne.s32.totalorder %s40, %s54
      %p56 = scmp.eq.s32.totalorder %s23, 0
      %p57 = por %p55, %p56
      %s59 = sadd.s32 %s58, 1
      %p62 = scmp.eq.s32.totalorder %s17, 1
      %p63 = scmp.ne.s32.totalorder %s58, %s60
      %p64 = scmp.eq.s32.totalorder %s17, 0
      %p65 = por %p63, %p64
      %p66 = scmp.ne.s32.totalorder %s58, %s60
      %p67 = scmp.eq.s32.totalorder %s22, 1
      %p68 = por %p66, %p67
      %p69 = scmp.ne.s32.totalorder %s60, %s61
      %p70 = scmp.eq.s32.totalorder %s22, 0
      %p71 = por %p69, %p70
      %p72 = scmp.ne.s32.totalorder %s60, %s61
      %p73 = scmp.eq.s32.totalorder %s23, 1
      %p74 = por %p72, %p73
      %p76 = scmp.ne.s32.totalorder %s61, %s75
      %p77 = scmp.eq.s32.totalorder %s23, 0
      %p78 = por %p76, %p77
      %s79 = ssub.s32 %s24, %s36
      %s80 = ssub.s32 %s25, %s32
      %s81 = sor.u32 %s79, %s80
      %p82 = scmp.eq.s32.totalorder %s81, 0
      %s84 = sadd.s32 %s83, 1
      %s85 = scalar_select %p82, %s83, %s84
      %p88 = pneg %p82
      %p89 = scmp.eq.s32.totalorder %s17, 1
      %p90 = por %p88, %p89
      %p91 = scmp.ne.s32.totalorder %s83, %s86
      %p92 = scmp.eq.s32.totalorder %s17, 0
      %p93 = por %p91, %p92
      %p94 = scmp.ne.s32.totalorder %s83, %s86
      %p95 = scmp.eq.s32.totalorder %s22, 1
      %p96 = por %p94, %p95
      %p97 = scmp.ne.s32.totalorder %s86, %s87
      %p98 = scmp.eq.s32.totalorder %s22, 0
      %p99 = por %p97, %p98
      %p100 = scmp.ne.s32.totalorder %s86, %s87
      %p101 = scmp.eq.s32.totalorder %s23, 1
      %p102 = por %p100, %p101
      %p104 = scmp.ne.s32.totalorder %s87, %s103
      %p105 = scmp.eq.s32.totalorder %s23, 0
      %p106 = por %p104, %p105
      %s107 = ssub.s32 %s24, %s36
      %s108 = ssub.s32 %s25, %s32
      %s109 = sor.u32 %s107, %s108
      %p110 = scmp.eq.s32.totalorder %s109, 0
      %s112 = sadd.s32 %s111, 1
      %s113 = scalar_select %p110, %s111, %s112
      %p116 = pneg %p110
      %p117 = scmp.eq.s32.totalorder %s17, 1
      %p118 = por %p116, %p117
      %p119 = scmp.ne.s32.totalorder %s111, %s114
      %p120 = scmp.eq.s32.totalorder %s17, 0
      %p121 = por %p119, %p120
      %p122 = scmp.ne.s32.totalorder %s111, %s114
      %p123 = scmp.eq.s32.totalorder %s22, 1
      %p124 = por %p122, %p123
      %p125 = scmp.ne.s32.totalorder %s114, %s115
      %p126 = scmp.eq.s32.totalorder %s22, 0
      %p127 = por %p125, %p126
      %p128 = scmp.ne.s32.totalorder %s114, %s115
      %p129 = scmp.eq.s32.totalorder %s23, 1
      %p130 = por %p128, %p129
      %p132 = scmp.ne.s32.totalorder %s115, %s131
      %p133 = scmp.eq.s32.totalorder %s23, 0
      %p134 = por %p132, %p133
      %p135 = scmp.le.s32.totalorder 1, %s17
      %p136 = scmp.lt.s32.totalorder %s17, 3
      %p137 = pnand %p135, %p136
      %p138 = pneg %p137
      // Predicated region
      $region9: #{tpu_custom_call.1} parent=5 // pred_check
        _
      $region10: #{tpu_custom_call.1} parent=5 // pred_check_branch
        %140 = sbr.rel (%p137) target = $region12
      $region11: #{tpu_custom_call.1} parent=5 // pred_region
        %s141 = ssub.s32 %s17, 1
        // Predicated region
        $region13: #{tpu_custom_call.1} parent=11 // pred_check
          %p142 = pneg %p50
        $region14: #{tpu_custom_call.1} parent=11 // pred_check_branch
          %144 = sbr.rel (%p142) target = $region16
        $region15: #{tpu_custom_call.1} parent=11 // pred_region
          %s146 = ssub.s32 64, 64
          %147 = vsyncadd [#allocation5], %s146
          %150 = dma.hbm_to_smem %s0, 64, [#allocation2], [#allocation5]
        $region16: #{tpu_custom_call.1} parent=11 // pred_fallthru
          _
        // Predicated region
        $region17: #{tpu_custom_call.1} parent=11 // pred_check
          %p151 = pneg %p71
        $region18: #{tpu_custom_call.1} parent=11 // pred_check_branch
          %153 = sbr.rel (%p151) target = $region20
        $region19: #{tpu_custom_call.1} parent=11 // pred_region
          %s155 = ssub.s32 16, 16
          %156 = vsyncadd [#allocation6], %s155
          %s158 = sshll.u32 %s1, 4
          %s159 = int_to_ptr.vmem [resolvable:$true] %s158
          %161 = dma.vmem_to_smem %s159, 16, [#allocation7], [#allocation6]
        $region20: #{tpu_custom_call.1} parent=11 // pred_fallthru
          _
      $region12: #{tpu_custom_call.1} parent=5 // pred_fallthru
        _
      %p162 = scmp.lt.s32.totalorder %s17, 2
      // Predicated region
      $region21: #{tpu_custom_call.1} parent=5 // pred_check
        %p163 = pneg %p162
      $region22: #{tpu_custom_call.1} parent=5 // pred_check_branch
        %165 = sbr.rel (%p163) target = $region24
      $region23: #{tpu_custom_call.1} parent=5 // pred_region
        // Predicated region
        $region25: #{tpu_custom_call.1} parent=23 // pred_check
          %p166 = pneg %p93
        $region26: #{tpu_custom_call.1} parent=23 // pred_check_branch
          %168 = sbr.rel (%p166) target = $region28
        $region27: #{tpu_custom_call.1} parent=23 // pred_region
          %s169 = sand.u32 %s83, 1
          %s170 = scalar_lea.sflag [#allocation3], %s169
          %s171 = sand.u32 %s83, 1
          %s172 = smul.addr %s171, 8
          %s173 = scalar_lea.vmem [#allocation8], %s172
          %s175 = ssub.s32 128, 128
          %176 = vsyncadd %s170, %s175
          %s177 = smul.addr %s24, 4
          %s178 = sadd.s32 %s25, %s177
          %s179 = smul.addr %s178, 32
          %s180 = scalar_lea.hbm %s2, %s179
          %s181 = sshll.u32 %s173, 4
          %s182 = int_to_ptr.vmem [resolvable:$true] %s181
          %187 = dma.hbm_to_vmem [thread:$0]  %s180, 128, %s182, %s170, 32, 32, 2
        $region28: #{tpu_custom_call.1} parent=23 // pred_fallthru
          _
      $region24: #{tpu_custom_call.1} parent=5 // pred_fallthru
        _
      %p188 = scmp.le.s32.totalorder 1, %s17
      %p189 = scmp.lt.s32.totalorder %s17, 3
      %p190 = pnand %p188, %p189
      %p191 = pneg %p190
      // Predicated region
      $region29: #{tpu_custom_call.1} parent=5 // pred_check
        _
      $region30: #{tpu_custom_call.1} parent=5 // pred_check_branch
        %193 = sbr.rel (%p190) target = $region32
      $region31: #{tpu_custom_call.1} parent=5 // pred_region
        %s194 = ssub.s32 %s17, 1
        // Predicated region
        $region33: #{tpu_custom_call.1} parent=31 // pred_check
          %p195 = pneg %p50
        $region34: #{tpu_custom_call.1} parent=31 // pred_check_branch
          %197 = sbr.rel (%p195) target = $region36
        $region35: #{tpu_custom_call.1} parent=31 // pred_region
          %198 = dma.done [#allocation5], 64
        $region36: #{tpu_custom_call.1} parent=31 // pred_fallthru
          _
        // Predicated region
        $region37: #{tpu_custom_call.1} parent=31 // pred_check
          %p199 = pneg %p71
        $region38: #{tpu_custom_call.1} parent=31 // pred_check_branch
          %201 = sbr.rel (%p199) target = $region40
        $region39: #{tpu_custom_call.1} parent=31 // pred_region
          %202 = dma.done [#allocation6], 16
        $region40: #{tpu_custom_call.1} parent=31 // pred_fallthru
          _
        %s203 = sand.u32 %s86, 1
        %s204 = scalar_lea.sflag [#allocation3], %s203
        %s205 = sand.u32 %s86, 1
        %s206 = smul.addr %s205, 8
        %s207 = scalar_lea.vmem [#allocation8], %s206
        // Predicated region
        $region41: #{tpu_custom_call.1} parent=31 // pred_check
          %p208 = pneg %p99
        $region42: #{tpu_custom_call.1} parent=31 // pred_check_branch
          %210 = sbr.rel (%p208) target = $region44
        $region43: #{tpu_custom_call.1} parent=31 // pred_region
          %211 = dma.done %s204, 128
        $region44: #{tpu_custom_call.1} parent=31 // pred_fallthru
          _
        %212 = sfence
        %p213 = pneg %p50
        %p214 = pneg %p47
        %p215 = pneg %p71
        %p216 = pneg %p68
        %s217 = sand.u32 %s86, 1
        %s218 = scalar_lea.sflag [#allocation3], %s217
        %s219 = sand.u32 %s86, 1
        %s220 = smul.addr %s219, 8
        %s221 = scalar_lea.vmem [#allocation8], %s220
        %p222 = pneg %p99
        %p223 = pneg %p96
        %p224 = pneg %p127
        %p225 = pneg %p124
        %s226 = sand.u32 %s114, 1
        %s227 = scalar_lea.sflag [#allocation4], %s226
        %s228 = sand.u32 %s114, 1
        %s229 = smul.addr %s228, 6
        %s230 = scalar_lea.vmem [#allocation9], %s229
        %v231 = vld [vmem:[%s207] sm:$0x3]
        %s232 = scalar_lea.vmem %s207, 2 [#allocation8]
        %v233 = vld [vmem:[%s232] sm:$0x3]
        %s234 = scalar_lea.vmem %s207, 4 [#allocation8]
        %v235 = vld [vmem:[%s234] sm:$0x3]
        %s236 = scalar_lea.vmem %s207, 6 [#allocation8]
        %v237 = vld [vmem:[%s236] sm:$0x3]
        %s238 = sld [smem:[#allocation2]]
        %v239 = vstv %s238
        %v240 = vmul.f32 %v231, %v239
        %s241 = sld [smem:[#allocation7]]
        %v242 = vstv %s241
        %v243 = vadd.f32 %v240, %v242
        %s244 = sld [smem:[#allocation2 + $0x1]]
        %v245 = vstv %s244
        %v246 = vmul.f32 %v233, %v245
        %v247 = vadd.f32 %v243, %v246
        %s248 = sld [smem:[#allocation2 + $0x2]]
        %v249 = vstv %s248
        %v250 = vmul.f32 %v235, %v249
        %v251 = vadd.f32 %v247, %v250
        %s252 = sld [smem:[#allocation2 + $0x3]]
        %v253 = vstv %s252
        %v254 = vmul.f32 %v237, %v253
        %v255 = vadd.f32 %v251, %v254
        %v256 = vxor.u32 %v255, 2147483648
        %v257 = vmul.f32 %v256, 1.442695
        %v258 = vpow.pop %v257
        %v259 = vadd.f32 %v258, 1.0
        %v260 = vrcp.pop %v259
        %v261 = vmul.f32 1.0, %v260
        %262 = vst [vmem:[%s230] sm:$0x3] %v261
        %s263 = sld [smem:[#allocation2 + $0x80]]
        %v264 = vstv %s263
        %v265 = vmul.f32 %v231, %v264
        %s266 = sld [smem:[#allocation7 + $0x1]]
        %v267 = vstv %s266
        %v268 = vadd.f32 %v265, %v267
        %s269 = sld [smem:[#allocation2 + $0x81]]
        %v270 = vstv %s269
        %v271 = vmul.f32 %v233, %v270
        %v272 = vadd.f32 %v268, %v271
        %s273 = sld [smem:[#allocation2 + $0x82]]
        %v274 = vstv %s273
        %v275 = vmul.f32 %v235, %v274
        %v276 = vadd.f32 %v272, %v275
        %s277 = sld [smem:[#allocation2 + $0x83]]
        %v278 = vstv %s277
        %v279 = vmul.f32 %v237, %v278
        %v280 = vadd.f32 %v276, %v279
        %v281 = vxor.u32 %v280, 2147483648
        %v282 = vmul.f32 %v281, 1.442695
        %v283 = vpow.pop %v282
        %v284 = vadd.f32 %v283, 1.0
        %v285 = vrcp.pop %v284
        %v286 = vmul.f32 1.0, %v285
        %s287 = scalar_lea.vmem %s230, 2 [#allocation9]
        %288 = vst [vmem:[%s287] sm:$0x3] %v286
        %s289 = sld [smem:[#allocation2 + $0x100]]
        %v290 = vstv %s289
        %v291 = vmul.f32 %v231, %v290
        %s292 = sld [smem:[#allocation7 + $0x2]]
        %v293 = vstv %s292
        %v294 = vadd.f32 %v291, %v293
        %s295 = sld [smem:[#allocation2 + $0x101]]
        %v296 = vstv %s295
        %v297 = vmul.f32 %v233, %v296
        %v298 = vadd.f32 %v294, %v297
        %s299 = sld [smem:[#allocation2 + $0x102]]
        %v300 = vstv %s299
        %v301 = vmul.f32 %v235, %v300
        %v302 = vadd.f32 %v298, %v301
        %s303 = sld [smem:[#allocation2 + $0x103]]
        %v304 = vstv %s303
        %v305 = vmul.f32 %v237, %v304
        %v306 = vadd.f32 %v302, %v305
        %v307 = vxor.u32 %v306, 2147483648
        %v308 = vmul.f32 %v307, 1.442695
        %v309 = vpow.pop %v308
        %v310 = vadd.f32 %v309, 1.0
        %v311 = vrcp.pop %v310
        %v312 = vmul.f32 1.0, %v311
        %s313 = scalar_lea.vmem %s230, 4 [#allocation9]
        %314 = vst [vmem:[%s313] sm:$0x3] %v312
        %s315 = sand.u32 %s114, 1
        %s316 = scalar_lea.sflag [#allocation4], %s315
        %s317 = sand.u32 %s114, 1
        %s318 = smul.addr %s317, 6
        %s319 = scalar_lea.vmem [#allocation9], %s318
        // Predicated region
        $region45: #{tpu_custom_call.1} parent=31 // pred_check
          %p320 = pneg %p124
        $region46: #{tpu_custom_call.1} parent=31 // pred_check_branch
          %322 = sbr.rel (%p320) target = $region48
        $region47: #{tpu_custom_call.1} parent=31 // pred_region
          %s324 = ssub.s32 96, 96
          %325 = vsyncadd %s316, %s324
          %s326 = smul.addr %s26, 3
          %s327 = sadd.s32 %s27, %s326
          %s328 = smul.addr %s327, 32
          %s329 = scalar_lea.hbm %s3, %s328
          %s330 = sshll.u32 %s319, 4
          %s331 = int_to_ptr.vmem [resolvable:$true] %s330
          %336 = dma.vmem_to_hbm [thread:$0]  %s331, 96, %s329, %s316, 32, 32, 2
        $region48: #{tpu_custom_call.1} parent=31 // pred_fallthru
          _
      $region32: #{tpu_custom_call.1} parent=5 // pred_fallthru
        _
      %p337 = scmp.le.s32.totalorder 2, %s17
      // Predicated region
      $region49: #{tpu_custom_call.1} parent=5 // pred_check
        %p338 = pneg %p337
      $region50: #{tpu_custom_call.1} parent=5 // pred_check_branch
        %340 = sbr.rel (%p338) target = $region52
      $region51: #{tpu_custom_call.1} parent=5 // pred_region
        %s341 = ssub.s32 %s17, 2
        // Predicated region
        $region53: #{tpu_custom_call.1} parent=51 // pred_check
          %p342 = pneg %p130
        $region54: #{tpu_custom_call.1} parent=51 // pred_check_branch
          %344 = sbr.rel (%p342) target = $region56
        $region55: #{tpu_custom_call.1} parent=51 // pred_region
          %s345 = sand.u32 %s115, 1
          %s346 = scalar_lea.sflag [#allocation4], %s345
          %s347 = sand.u32 %s115, 1
          %s348 = smul.addr %s347, 6
          %s349 = scalar_lea.vmem [#allocation9], %s348
          %350 = dma.done %s346, 96
        $region56: #{tpu_custom_call.1} parent=51 // pred_fallthru
          _
      $region52: #{tpu_custom_call.1} parent=5 // pred_fallthru
        _
    $region6: #{tpu_custom_call.1} parent=1 // loop_footer
      %s21 = sadd.s32 1, %s17
    $region7: #{tpu_custom_call.1} parent=1 // loop_footer_branch
      %16 = sbr.rel target = $region3
    $region8: #{tpu_custom_call.1} parent=1 // loop_exit
      _
    %351 = vsyncpa [#allocation3], 1
    %s352 = scalar_lea.sflag [#allocation3], 1
    %353 = vsyncpa %s352, 1
    %354 = vsyncpa [#allocation4], 1
    %s355 = scalar_lea.sflag [#allocation4], 1
    %356 = vsyncpa %s355, 1
    %357 = vsyncpa [#allocation5], 1
    %s358 = scalar_lea.sflag [#allocation5], 1
    %359 = vsyncpa %s358, 1
    %360 = vsyncpa [#allocation6], 1
    %s361 = scalar_lea.sflag [#allocation6], 1
    %362 = vsyncpa %s361, 1

</llo_original>
